<compile_context>
chip_gen: v7x
topology: tpu7x:2x2x1
jax: 0.10.0
libtpu: 0.0.40
codegen_flags: <defaults>
</compile_context>

<pallas_src>
import functools
import math

import jax
import jax.numpy as jnp
from jax.experimental import pallas as pl
from jax.experimental.pallas import tpu as pltpu

LN_EPS = 1e-5  # nn.LayerNorm default


def _round_up(n, m):
    return ((n + m - 1) // m) * m


# --------------------------------------------------------------------------
# Kernel
# --------------------------------------------------------------------------
def _meta_adapter_kernel(x_ref, lnw_ref, lnb_ref, wd_ref, bd_ref, wu_ref, bu_ref,
                         scale_ref, o_ref, *, fuse_residual):
    # ---- LayerNorm over the feature (lane) dim, one-pass stats, f32 math ----
    x = x_ref[...].astype(jnp.float32)
    inv_n = jnp.float32(1.0 / x.shape[-1])
    s = jnp.sum(x, axis=-1, keepdims=True)
    s2 = jnp.sum(x * x, axis=-1, keepdims=True)
    mean = s * inv_n
    var = s2 * inv_n - mean * mean
    xn = (x - mean) * jax.lax.rsqrt(var + LN_EPS)
    xn = xn * lnw_ref[...] + lnb_ref[...]

    # ---- down_proj + ReLU: bf16 MXU operands, f32 accumulation ----
    h = jnp.dot(xn.astype(wd_ref.dtype), wd_ref[...],
                preferred_element_type=jnp.float32)
    h = jnp.maximum(h + bd_ref[...], 0.0)

    # ---- up_proj, then f32 epilogue scale (alpha/bottle or meta_scale) ----
    y = jnp.dot(h.astype(wu_ref.dtype), wu_ref[...],
                preferred_element_type=jnp.float32)
    y = (y + bu_ref[...]) * scale_ref[...]

    if fuse_residual:
        y = y + x  # reuse the x tile already resident in VMEM

    o_ref[...] = y.astype(o_ref.dtype)


# --------------------------------------------------------------------------
# Parameter preparation (do ONCE per weight update, not per forward call)
# --------------------------------------------------------------------------
def prepare_meta_adapter_params(params, *, alpha=1.0, use_meta=False,
                                matmul_dtype=jnp.bfloat16, bottle_pad_to=128):
    """Cast / pad / reshape raw params into kernel-ready form.

    Linear weights are stored pre-transposed as (in, out).  bottle_dim is
    zero-padded to a multiple of `bottle_pad_to` (128) -- padded w_down columns,
    b_down entries and w_up rows are zero, so the math stays exact.
    """
    in_dim, bottle_dim = params["w_down"].shape
    bp = _round_up(bottle_dim, bottle_pad_to)
    pad = bp - bottle_dim

    wd = params["w_down"].astype(matmul_dtype)           # (in, bottle)
    bd = params["b_down"].astype(jnp.float32)            # (bottle,)
    wu = params["w_up"].astype(matmul_dtype)              # (bottle, in)
    if pad:
        wd = jnp.pad(wd, ((0, 0), (0, pad)))
        bd = jnp.pad(bd, ((0, pad),))
        wu = jnp.pad(wu, ((0, pad), (0, 0)))

    if use_meta and params.get("meta_scale") is not None:
        scale = params["meta_scale"].astype(jnp.float32)
    else:
        scale = jnp.full((in_dim,), alpha / bottle_dim, jnp.float32)

    return {
        "_prepared": True,
        "in_dim": in_dim,
        "bottle_dim": bottle_dim,
        "bottle_pad": bp,
        "ln_w": params["ln_w"].astype(jnp.float32).reshape(1, in_dim),
        "ln_b": params["ln_b"].astype(jnp.float32).reshape(1, in_dim),
        "w_down": wd,
        "b_down": bd.reshape(1, bp),
        "w_up": wu,
        "b_up": params["b_up"].astype(jnp.float32).reshape(1, in_dim),
        "scale": scale.reshape(1, in_dim),
    }


# --------------------------------------------------------------------------
# VMEM budget / tile selection
# --------------------------------------------------------------------------
def _default_vmem_limit_bytes():
    cap = None
    try:
        info = pltpu.get_tpu_info()
        cap = getattr(info, "vmem_capacity_bytes", None)
    except Exception:
        cap = None
    if not cap:
        cap = 64 * 1024 * 1024  # conservative: v7x-sized VMEM
    # ~75% of physical: v7x(64MiB)->48MiB, v5e/v6e(128MiB)->96MiB
    return int(cap * 3 // 4)


def _pick_row_tile(in_dim, bottle_pad, x_bytes, mm_bytes, vmem_limit_bytes):
    budget = int(vmem_limit_bytes * 0.7)
    # grid-invariant, single-buffered blocks
    const_bytes = 2 * in_dim * bottle_pad * mm_bytes + (5 * in_dim + bottle_pad) * 4
    budget = max(budget - const_bytes, 0)
    # per row: double-buffered x/out tiles + f32 temporaries (x, xn, y) + h
    per_row = 2 * in_dim * (x_bytes + x_bytes) + 3 * in_dim * 4 + bottle_pad * 4
    rt = budget // max(per_row, 1)
    return int(max(8, min(rt, 1024)))


# --------------------------------------------------------------------------
# Forward wrapper
# --------------------------------------------------------------------------
def meta_adapter_forward(x, params, *, alpha=1.0, use_meta=False, residual=False,
                         row_tile=None, matmul_dtype=jnp.bfloat16,
                         vmem_limit_bytes=None):
    """x: (..., in_dim) -> same shape (x.dtype follows through, so bf16 x gives
    bf16 output and halves HBM traffic on this memory-bound kernel).

    `params` may be raw (init_meta_adapter_params-style) or pre-prepared via
    prepare_meta_adapter_params(); when pre-prepared, alpha/use_meta/matmul_dtype
    are already baked in and ignored here.
    """
    if not params.get("_prepared", False):
        params = prepare_meta_adapter_params(params, alpha=alpha, use_meta=use_meta,
                                             matmul_dtype=matmul_dtype)

    in_dim = params["in_dim"]
    bp = params["bottle_pad"]
    mm_bytes = params["w_down"].dtype.itemsize

    orig_shape = x.shape
    x2 = x.reshape(-1, in_dim)
    M = x2.shape[0]
    x_bytes = x2.dtype.itemsize

    if vmem_limit_bytes is None:
        vmem_limit_bytes = _default_vmem_limit_bytes()

    # Sublane-pack granule for the row axis: 8 rows f32, 16 bf16, 32 for 1-byte.
    granule = 8 if x_bytes >= 4 else (16 if x_bytes == 2 else 32)

    if row_tile is None:
        row_tile = _pick_row_tile(in_dim, bp, x_bytes, mm_bytes, vmem_limit_bytes)
    row_tile = max(granule, _round_up(row_tile, granule))

    # Keep >= 2 grid steps when M allows, so the "parallel" axis can shard
    # across both TensorCores on v7x (no-op on single-TC v5e/v6e).
    m_rounded = _round_up(M, granule)
    if m_rounded >= 2 * granule:
        row_tile = min(row_tile, _round_up(m_rounded // 2, granule))
    row_tile = min(row_tile, m_rounded)
    row_tile = max(granule, _round_up(row_tile, granule))

    M_pad = _round_up(M, row_tile)
    if M_pad != M:
        x2 = jnp.pad(x2, ((0, M_pad - M), (0, 0)))
    grid = (M_pad // row_tile,)

    # Grid-invariant blocks: constant index_map, single-buffered when supported.
    buffered_kw = {"pipeline_mode": pl.Buffered(1)} if hasattr(pl, "Buffered") else {}

    def const_spec(shape):
        return pl.BlockSpec(shape, lambda i: (0, 0), **buffered_kw)

    cost = pl.CostEstimate(
        flops=int(4 * M_pad * in_dim * bp + 12 * M_pad * in_dim),
        transcendentals=int(M_pad),  # one rsqrt per row
        bytes_accessed=int(2 * M_pad * in_dim * x_bytes
                           + 2 * in_dim * bp * mm_bytes
                           + (6 * in_dim + bp) * 4),
    )

    kernel = functools.partial(_meta_adapter_kernel, fuse_residual=residual)

    out = pl.pallas_call(
        kernel,
        out_shape=jax.ShapeDtypeStruct((M_pad, in_dim), x.dtype),
        grid_spec=pltpu.PrefetchScalarGridSpec(
            num_scalar_prefetch=0,
            grid=grid,
            in_specs=[
                pl.BlockSpec((row_tile, in_dim), lambda i: (i, 0)),  # x tile
                const_spec((1, in_dim)),        # LN weight  (f32)
                const_spec((1, in_dim)),        # LN bias    (f32)
                const_spec((in_dim, bp)),       # W_down^T   (bf16, bottle padded)
                const_spec((1, bp)),            # b_down     (f32, padded)
                const_spec((bp, in_dim)),       # W_up^T     (bf16, bottle padded)
                const_spec((1, in_dim)),        # b_up       (f32)
                const_spec((1, in_dim)),        # output scale (f32 epilogue)
            ],
            out_specs=pl.BlockSpec((row_tile, in_dim), lambda i: (i, 0)),
        ),
        compiler_params=pltpu.CompilerParams(
            dimension_semantics=("parallel",),
            vmem_limit_bytes=int(vmem_limit_bytes)),
        cost_estimate=cost,
    )(x2, params["ln_w"], params["ln_b"], params["w_down"], params["b_down"],
      params["w_up"], params["b_up"], params["scale"])

    if M_pad != M:
        out = out[:M]
    return out.reshape(orig_shape)


# --------------------------------------------------------------------------
# Init + pure-JAX reference (for correctness check)
# --------------------------------------------------------------------------
def init_meta_adapter_params(key, in_dim, bottle_dim, dtype=jnp.float32):
    """Deterministic init mirroring MetaAdapter.__init__ (weights stored as (in, out))."""
    ln_w = jnp.ones((in_dim,), dtype)
    ln_b = jnp.zeros((in_dim,), dtype)
    # kaiming_normal_(a=sqrt(5)): std = sqrt(2/(1+5)) / sqrt(fan_in), fan_in = in_dim
    std = math.sqrt(2.0 / 6.0) / math.sqrt(in_dim)
    w_down = (jax.random.normal(key, (in_dim, bottle_dim)) * std).astype(dtype)
    b_down = jnp.zeros((bottle_dim,), dtype)
    w_up = jnp.zeros((bottle_dim, in_dim), dtype)   # zero-init per module
    b_up = jnp.zeros((in_dim,), dtype)
    meta_scale = jnp.ones((in_dim,), dtype)         # registered when use_meta=True
    return {"ln_w": ln_w, "ln_b": ln_b, "w_down": w_down, "b_down": b_down,
            "w_up": w_up, "b_up": b_up, "meta_scale": meta_scale}


def meta_adapter_ref(x, params, *, alpha=1.0, use_meta=False):
    """Pure-JAX f32 reference mirroring MetaAdapter.forward."""
    bottle_dim = params["w_down"].shape[1]
    xf = x.astype(jnp.float32)
    mean = jnp.mean(xf, axis=-1, keepdims=True)
    var = jnp.mean((xf - mean) ** 2, axis=-1, keepdims=True)
    xn = (xf - mean) / jnp.sqrt(var + LN_EPS)
    xn = xn * params["ln_w"].astype(jnp.float32) + params["ln_b"].astype(jnp.float32)
    h = jnp.maximum(xn @ params["w_down"].astype(jnp.float32)
                    + params["b_down"].astype(jnp.float32), 0.0)
    y = h @ params["w_up"].astype(jnp.float32) + params["b_up"].astype(jnp.float32)
    if use_meta and params.get("meta_scale") is not None:
        return y * params["meta_scale"].astype(jnp.float32)
    return y * (alpha / bottle_dim)


# --------------------------------------------------------------------------
# Demo / correctness check
# --------------------------------------------------------------------------
if __name__ == "__main__":
    key = jax.random.PRNGKey(0)
    k_x, k_w, k_up, k_meta = jax.random.split(key, 4)

    # Small, lane-friendly demo shapes (feature dim multiple of 128).
    batch, seq, in_dim, bottle_dim = 2, 16, 128, 64
    alpha = 1.0

    x = jax.random.normal(k_x, (batch, seq, in_dim), dtype=jnp.float32)
    params = init_meta_adapter_params(k_w, in_dim, bottle_dim, dtype=jnp.float32)
    # With the module's true init (up_proj zeros) the output would be all-zero;
    # overwrite with small random values so the correctness check is non-trivial.
    params["w_up"] = (jax.random.normal(k_up, (bottle_dim, in_dim)) * 0.05).astype(jnp.float32)
    params["meta_scale"] = (1.0 + 0.1 * jax.random.normal(k_meta, (in_dim,))).astype(jnp.float32)

    for use_meta in (False, True):
        for residual in (False, True):
            out = meta_adapter_forward(x, params, alpha=alpha, use_meta=use_meta,
                                       residual=residual)
            out = jax.block_until_ready(out)
            ref = meta_adapter_ref(x, params, alpha=alpha, use_meta=use_meta)
            if residual:
                ref = x.astype(jnp.float32) + ref
            assert out.shape == x.shape
            # bf16 MXU operands => compare at bf16-appropriate (normalized) tolerance.
            rel = float(jnp.max(jnp.abs(out.astype(jnp.float32) - ref))
                        / (jnp.max(jnp.abs(ref)) + 1e-12))
            assert rel < 2.5e-2, (
                f"mismatch vs reference (use_meta={use_meta}, residual={residual}): rel={rel}")

    print("KERNEL_OK")
</pallas_src>

<mosaic_0001>
module attributes {stable_mosaic.version = 11 : i64} {
  func.func @_meta_adapter_kernel(%arg0: i32, %arg1: memref<16x128xf32, #tpu.memory_space<vmem>>, %arg2: memref<1x128xf32, #tpu.memory_space<vmem>>, %arg3: memref<1x128xf32, #tpu.memory_space<vmem>>, %arg4: memref<128x128xbf16, #tpu.memory_space<vmem>>, %arg5: memref<1x128xf32, #tpu.memory_space<vmem>>, %arg6: memref<128x128xbf16, #tpu.memory_space<vmem>>, %arg7: memref<1x128xf32, #tpu.memory_space<vmem>>, %arg8: memref<1x128xf32, #tpu.memory_space<vmem>>, %arg9: memref<16x128xf32, #tpu.memory_space<vmem>>) attributes {dimension_semantics = [#tpu.dimension_semantics<parallel>], iteration_bounds = array<i64: 2>, scalar_prefetch = 0 : i64, scratch_operands = 0 : i64, tpu.core_type = #tpu.core_type<tc>, window_params = [{transform_indices = @transform_0, window_bounds = array<i64: 16, 128>}, {pipeline_mode = #tpu.pipeline_mode<synchronous>, transform_indices = @transform_1, window_bounds = array<i64: 1, 128>}, {pipeline_mode = #tpu.pipeline_mode<synchronous>, transform_indices = @transform_2, window_bounds = array<i64: 1, 128>}, {pipeline_mode = #tpu.pipeline_mode<synchronous>, transform_indices = @transform_3, window_bounds = array<i64: 128, 128>}, {pipeline_mode = #tpu.pipeline_mode<synchronous>, transform_indices = @transform_4, window_bounds = array<i64: 1, 128>}, {pipeline_mode = #tpu.pipeline_mode<synchronous>, transform_indices = @transform_5, window_bounds = array<i64: 128, 128>}, {pipeline_mode = #tpu.pipeline_mode<synchronous>, transform_indices = @transform_6, window_bounds = array<i64: 1, 128>}, {pipeline_mode = #tpu.pipeline_mode<synchronous>, transform_indices = @transform_7, window_bounds = array<i64: 1, 128>}, {transform_indices = @transform_8, window_bounds = array<i64: 16, 128>}]} {
    %c0 = arith.constant 0 : index
    %c0_0 = arith.constant 0 : index
    %0 = vector.load %arg1[%c0, %c0_0] : memref<16x128xf32, #tpu.memory_space<vmem>>, vector<16x128xf32>
    %cst = arith.constant dense<0.000000e+00> : vector<16xf32>
    %1 = vector.multi_reduction <add>, %0, %cst [1] : vector<16x128xf32> to vector<16xf32>
    %2 = vector.shape_cast %1 : vector<16xf32> to vector<16x1xf32>
    %3 = arith.mulf %0, %0 : vector<16x128xf32>
    %cst_1 = arith.constant dense<0.000000e+00> : vector<16xf32>
    %4 = vector.multi_reduction <add>, %3, %cst_1 [1] : vector<16x128xf32> to vector<16xf32>
    %5 = vector.shape_cast %4 : vector<16xf32> to vector<16x1xf32>
    %cst_2 = arith.constant 7.812500e-03 : f32
    %6 = vector.broadcast %cst_2 : f32 to vector<16x1xf32>
    %7 = arith.mulf %2, %6 : vector<16x1xf32>
    %cst_3 = arith.constant 7.812500e-03 : f32
    %8 = vector.broadcast %cst_3 : f32 to vector<16x1xf32>
    %9 = arith.mulf %5, %8 : vector<16x1xf32>
    %10 = arith.mulf %7, %7 : vector<16x1xf32>
    %11 = arith.subf %9, %10 : vector<16x1xf32>
    %12 = vector.broadcast %7 : vector<16x1xf32> to vector<16x128xf32>
    %13 = arith.subf %0, %12 : vector<16x128xf32>
    %cst_4 = arith.constant 9.99999974E-6 : f32
    %14 = vector.broadcast %cst_4 : f32 to vector<16x1xf32>
    %15 = arith.addf %11, %14 : vector<16x1xf32>
    %16 = math.rsqrt %15 : vector<16x1xf32>
    %17 = vector.broadcast %16 : vector<16x1xf32> to vector<16x128xf32>
    %18 = arith.mulf %13, %17 : vector<16x128xf32>
    %c0_5 = arith.constant 0 : index
    %c0_6 = arith.constant 0 : index
    %19 = vector.load %arg2[%c0_5, %c0_6] : memref<1x128xf32, #tpu.memory_space<vmem>>, vector<1x128xf32>
    %20 = vector.broadcast %19 : vector<1x128xf32> to vector<16x128xf32>
    %21 = arith.mulf %18, %20 : vector<16x128xf32>
    %c0_7 = arith.constant 0 : index
    %c0_8 = arith.constant 0 : index
    %22 = vector.load %arg3[%c0_7, %c0_8] : memref<1x128xf32, #tpu.memory_space<vmem>>, vector<1x128xf32>
    %23 = vector.broadcast %22 : vector<1x128xf32> to vector<16x128xf32>
    %24 = arith.addf %21, %23 : vector<16x128xf32>
    %25 = arith.truncf %24 : vector<16x128xf32> to vector<16x128xbf16>
    %c0_9 = arith.constant 0 : index
    %c0_10 = arith.constant 0 : index
    %26 = vector.load %arg4[%c0_9, %c0_10] : memref<128x128xbf16, #tpu.memory_space<vmem>>, vector<128x128xbf16>
    %cst_11 = arith.constant dense<0.000000e+00> : vector<16x128xf32>
    %27 = tpu.matmul %25, %26, %cst_11 {dimension_numbers = #tpu.dot_dimension_numbers<[1], [0], [0], [1], [0, 0, 1, 1], [], []>} : vector<16x128xbf16>, vector<128x128xbf16>, vector<16x128xf32> -> vector<16x128xf32>
    %c0_12 = arith.constant 0 : index
    %c0_13 = arith.constant 0 : index
    %28 = vector.load %arg5[%c0_12, %c0_13] : memref<1x128xf32, #tpu.memory_space<vmem>>, vector<1x128xf32>
    %29 = vector.broadcast %28 : vector<1x128xf32> to vector<16x128xf32>
    %30 = arith.addf %27, %29 : vector<16x128xf32>
    %cst_14 = arith.constant 0.000000e+00 : f32
    %31 = vector.broadcast %cst_14 : f32 to vector<16x128xf32>
    %32 = arith.maximumf %30, %31 : vector<16x128xf32>
    %33 = arith.truncf %32 : vector<16x128xf32> to vector<16x128xbf16>
    %c0_15 = arith.constant 0 : index
    %c0_16 = arith.constant 0 : index
    %34 = vector.load %arg6[%c0_15, %c0_16] : memref<128x128xbf16, #tpu.memory_space<vmem>>, vector<128x128xbf16>
    %cst_17 = arith.constant dense<0.000000e+00> : vector<16x128xf32>
    %35 = tpu.matmul %33, %34, %cst_17 {dimension_numbers = #tpu.dot_dimension_numbers<[1], [0], [0], [1], [0, 0, 1, 1], [], []>} : vector<16x128xbf16>, vector<128x128xbf16>, vector<16x128xf32> -> vector<16x128xf32>
    %c0_18 = arith.constant 0 : index
    %c0_19 = arith.constant 0 : index
    %36 = vector.load %arg7[%c0_18, %c0_19] : memref<1x128xf32, #tpu.memory_space<vmem>>, vector<1x128xf32>
    %37 = vector.broadcast %36 : vector<1x128xf32> to vector<16x128xf32>
    %38 = arith.addf %35, %37 : vector<16x128xf32>
    %c0_20 = arith.constant 0 : index
    %c0_21 = arith.constant 0 : index
    %39 = vector.load %arg8[%c0_20, %c0_21] : memref<1x128xf32, #tpu.memory_space<vmem>>, vector<1x128xf32>
    %40 = vector.broadcast %39 : vector<1x128xf32> to vector<16x128xf32>
    %41 = arith.mulf %38, %40 : vector<16x128xf32>
    %c0_22 = arith.constant 0 : index
    %c0_23 = arith.constant 0 : index
    %42 = vector.load %arg9[%c0_22, %c0_23] : memref<16x128xf32, #tpu.memory_space<vmem>>, vector<16x128xf32>
    tpu.vector_store %arg9[%c0_22, %c0_23], %41 {strides = array<i32>} : memref<16x128xf32, #tpu.memory_space<vmem>>, vector<16x128xf32>,
    return
  }
  func.func @transform_0(%arg0: i32) -> (i32, i32) {
    %c0_i32 = arith.constant 0 : i32
    %c0_i32_0 = arith.constant 0 : i32
    return %arg0, %c0_i32 : i32, i32
  }
  func.func @transform_1(%arg0: i32) -> (i32, i32) {
    %c0_i32 = arith.constant 0 : i32
    %c0_i32_0 = arith.constant 0 : i32
    %c0_i32_1 = arith.constant 0 : i32
    return %c0_i32, %c0_i32_0 : i32, i32
  }
  func.func @transform_2(%arg0: i32) -> (i32, i32) {
    %c0_i32 = arith.constant 0 : i32
    %c0_i32_0 = arith.constant 0 : i32
    %c0_i32_1 = arith.constant 0 : i32
    return %c0_i32, %c0_i32_0 : i32, i32
  }
  func.func @transform_3(%arg0: i32) -> (i32, i32) {
    %c0_i32 = arith.constant 0 : i32
    %c0_i32_0 = arith.constant 0 : i32
    %c0_i32_1 = arith.constant 0 : i32
    return %c0_i32, %c0_i32_0 : i32, i32
  }
  func.func @transform_4(%arg0: i32) -> (i32, i32) {
    %c0_i32 = arith.constant 0 : i32
    %c0_i32_0 = arith.constant 0 : i32
    %c0_i32_1 = arith.constant 0 : i32
    return %c0_i32, %c0_i32_0 : i32, i32
  }
  func.func @transform_5(%arg0: i32) -> (i32, i32) {
    %c0_i32 = arith.constant 0 : i32
    %c0_i32_0 = arith.constant 0 : i32
    %c0_i32_1 = arith.constant 0 : i32
    return %c0_i32, %c0_i32_0 : i32, i32
  }
  func.func @transform_6(%arg0: i32) -> (i32, i32) {
    %c0_i32 = arith.constant 0 : i32
    %c0_i32_0 = arith.constant 0 : i32
    %c0_i32_1 = arith.constant 0 : i32
    return %c0_i32, %c0_i32_0 : i32, i32
  }
  func.func @transform_7(%arg0: i32) -> (i32, i32) {
    %c0_i32 = arith.constant 0 : i32
    %c0_i32_0 = arith.constant 0 : i32
    %c0_i32_1 = arith.constant 0 : i32
    return %c0_i32, %c0_i32_0 : i32, i32
  }
  func.func @transform_8(%arg0: i32) -> (i32, i32) {
    %c0_i32 = arith.constant 0 : i32
    %c0_i32_0 = arith.constant 0 : i32
    return %arg0, %c0_i32 : i32, i32
  }
}

</mosaic_0001>

<llo_original>
// kernel: tpu_custom_call.1
$region0: #{tpu_custom_call.1}
  #allocation0 [shape = 'u32[]', space=smem, size = 0x4, offset = 0x4, fixed_abs, tag = 'smem constant byte address 0x4 - core index']
  #allocation1 [shape = 'u32[144,128]{1,0:T(1,128)}', space=vmem, size = 0x12000, scoped, tag = 'internal scratch']
  %s0 = inlined_call_operand.hbm [shape: f32[32,128], index: 0, kind: input, shape index: {}]
  %s1 = inlined_call_operand.vmem [shape: f32[1,128], index: 1, kind: input, shape index: {}]
  %s2 = inlined_call_operand.vmem [shape: f32[1,128], index: 2, kind: input, shape index: {}]
  %s3 = inlined_call_operand.hbm [shape: bf16[128,128], index: 3, kind: input, shape index: {}]
  %s4 = inlined_call_operand.vmem [shape: f32[1,128], index: 4, kind: input, shape index: {}]
  %s5 = inlined_call_operand.hbm [shape: bf16[128,128], index: 5, kind: input, shape index: {}]
  %s6 = inlined_call_operand.vmem [shape: f32[1,128], index: 6, kind: input, shape index: {}]
  %s7 = inlined_call_operand.vmem [shape: f32[1,128], index: 7, kind: input, shape index: {}]
  %s8 = inlined_call_operand.hbm [shape: f32[32,128], index: 8, kind: output, shape index: {}]
  %s9 = sld [smem:[#allocation0]]
  $region77: #{tpu_custom_call.1} parent=0
    _
  %s11 = ssub.s32 1, %s9
  %s12 = scalar_select 0, %s11, %s9
  $region1: #{tpu_custom_call.1} parent=0
    #allocation2 [shape = 'u8[16384]{0}', space=vmem, size = 0x4000, scoped, tag = 'input window, operand 0']
    #allocation3 [shape = 's32[2]{0}', space=sflag, size = 0x8, scoped, tag = 'scoped memory for tpu_custom_call.1']
    #allocation4 [shape = 's32[2]{0}', space=sflag, size = 0x8, scoped, tag = 'scoped memory for tpu_custom_call.1']
    #allocation5 [shape = 'u8[32768]{0}', space=vmem, size = 0x8000, scoped, tag = 'input window, operand 3, single buffered']
    #allocation6 [shape = 's32[1]{0}', space=sflag, size = 0x4, scoped, tag = 'scoped memory for tpu_custom_call.1']
    #allocation7 [shape = 'u8[32768]{0}', space=vmem, size = 0x8000, scoped, tag = 'input window, operand 5, single buffered']
    #allocation8 [shape = 'u8[16384]{0}', space=vmem, size = 0x4000, scoped, tag = 'output window, operand 0']
    %13 = vsyncpa [#allocation3], 0
    %s14 = scalar_lea.sflag [#allocation3], 1
    %15 = vsyncpa %s14, 0
    %16 = vsyncpa [#allocation6], 0
    %17 = vsyncpa [#allocation4], 0
    %s18 = scalar_lea.sflag [#allocation4], 1
    %19 = vsyncpa %s18, 0
    loop: start=0, step=1, limit=4
    $region2: #{tpu_custom_call.1} parent=1 // loop_pre_header
      _
    $region3: #{tpu_custom_call.1} parent=1 // loop_header
      %s21 = sphi 0, %s25
      %p22 = scmp.ge.s32.totalorder %s21, 4
      %s31 = sphi 0, %s33
      %s34 = sphi 0, %s31
      %s35 = sphi 0, %s34
      %s51 = sphi 0, %s35
      %s55 = sphi 0, %s55
      %s57 = sphi 0, %s55
      %s58 = sphi 0, %s57
      %s72 = sphi 0, %s58
      %s76 = sphi 0, %s76
      %s78 = sphi 0, %s76
      %s79 = sphi 0, %s78
      %s93 = sphi 0, %s79
      %s97 = sphi 0, %s97
      %s99 = sphi 0, %s97
      %s100 = sphi 0, %s99
      %s114 = sphi 0, %s100
      %s118 = sphi 0, %s118
      %s120 = sphi 0, %s118
      %s121 = sphi 0, %s120
      %s135 = sphi 0, %s121
      %s139 = sphi 0, %s139
      %s141 = sphi 0, %s139
      %s142 = sphi 0, %s141
      %s156 = sphi 0, %s142
      %s160 = sphi 0, %s160
      %s162 = sphi 0, %s160
      %s163 = sphi 0, %s162
      %s177 = sphi 0, %s163
      %s181 = sphi 0, %s181
      %s183 = sphi 0, %s181
      %s184 = sphi 0, %s183
      %s198 = sphi 0, %s184
      %s204 = sphi 0, %s206
      %s207 = sphi 0, %s204
      %s208 = sphi 0, %s207
      %s224 = sphi 0, %s208
    $region4: #{tpu_custom_call.1} parent=1 // loop_header_branch
      %24 = sbr.rel (%p22) target = $region8
    $region5: #{tpu_custom_call.1} parent=1 // loop_body
      %s26 = ssub.s32 %s21, 1
      %s27 = ssub.s32 %s21, 2
      %s28 = sadd.s32 %s21, 1
      %s29 = ssub.s32 %s21, %s28
      %p30 = scmp.eq.s32.totalorder %s29, 0
      %s32 = sadd.s32 %s31, 1
      %s33 = scalar_select %p30, %s31, %s32
      %p36 = pneg %p30
      %p37 = scmp.eq.s32.totalorder %s21, 1
      %p38 = por %p36, %p37
      %p39 = scmp.ne.s32.totalorder %s31, %s34
      %p40 = scmp.eq.s32.totalorder %s21, 0
      %p41 = por %p39, %p40
      %p42 = scmp.ne.s32.totalorder %s31, %s34
      %p43 = scmp.eq.s32.totalorder %s26, 1
      %p44 = por %p42, %p43
      %p45 = scmp.ne.s32.totalorder %s34, %s35
      %p46 = scmp.eq.s32.totalorder %s26, 0
      %p47 = por %p45, %p46
      %p48 = scmp.ne.s32.totalorder %s34, %s35
      %p49 = scmp.eq.s32.totalorder %s27, 1
      %p50 = por %p48, %p49
      %p52 = scmp.ne.s32.totalorder %s35, %s51
      %p53 = scmp.eq.s32.totalorder %s27, 0
      %p54 = por %p52, %p53
      %s56 = sadd.s32 %s55, 1
      %p59 = scmp.eq.s32.totalorder %s21, 1
      %p60 = scmp.ne.s32.totalorder %s55, %s57
      %p61 = scmp.eq.s32.totalorder %s21, 0
      %p62 = por %p60, %p61
      %p63 = scmp.ne.s32.totalorder %s55, %s57
      %p64 = scmp.eq.s32.totalorder %s26, 1
      %p65 = por %p63, %p64
      %p66 = scmp.ne.s32.totalorder %s57, %s58
      %p67 = scmp.eq.s32.totalorder %s26, 0
      %p68 = por %p66, %p67
      %p69 = scmp.ne.s32.totalorder %s57, %s58
      %p70 = scmp.eq.s32.totalorder %s27, 1
      %p71 = por %p69, %p70
      %p73 = scmp.ne.s32.totalorder %s58, %s72
      %p74 = scmp.eq.s32.totalorder %s27, 0
      %p75 = por %p73, %p74
      %s77 = sadd.s32 %s76, 1
      %p80 = scmp.eq.s32.totalorder %s21, 1
      %p81 = scmp.ne.s32.totalorder %s76, %s78
      %p82 = scmp.eq.s32.totalorder %s21, 0
      %p83 = por %p81, %p82
      %p84 = scmp.ne.s32.totalorder %s76, %s78
      %p85 = scmp.eq.s32.totalorder %s26, 1
      %p86 = por %p84, %p85
      %p87 = scmp.ne.s32.totalorder %s78, %s79
      %p88 = scmp.eq.s32.totalorder %s26, 0
      %p89 = por %p87, %p88
      %p90 = scmp.ne.s32.totalorder %s78, %s79
      %p91 = scmp.eq.s32.totalorder %s27, 1
      %p92 = por %p90, %p91
      %p94 = scmp.ne.s32.totalorder %s79, %s93
      %p95 = scmp.eq.s32.totalorder %s27, 0
      %p96 = por %p94, %p95
      %s98 = sadd.s32 %s97, 1
      %p101 = scmp.eq.s32.totalorder %s21, 1
      %p102 = scmp.ne.s32.totalorder %s97, %s99
      %p103 = scmp.eq.s32.totalorder %s21, 0
      %p104 = por %p102, %p103
      %p105 = scmp.ne.s32.totalorder %s97, %s99
      %p106 = scmp.eq.s32.totalorder %s26, 1
      %p107 = por %p105, %p106
      %p108 = scmp.ne.s32.totalorder %s99, %s100
      %p109 = scmp.eq.s32.totalorder %s26, 0
      %p110 = por %p108, %p109
      %p111 = scmp.ne.s32.totalorder %s99, %s100
      %p112 = scmp.eq.s32.totalorder %s27, 1
      %p113 = por %p111, %p112
      %p115 = scmp.ne.s32.totalorder %s100, %s114
      %p116 = scmp.eq.s32.totalorder %s27, 0
      %p117 = por %p115, %p116
      %s119 = sadd.s32 %s118, 1
      %p122 = scmp.eq.s32.totalorder %s21, 1
      %p123 = scmp.ne.s32.totalorder %s118, %s120
      %p124 = scmp.eq.s32.totalorder %s21, 0
      %p125 = por %p123, %p124
      %p126 = scmp.ne.s32.totalorder %s118, %s120
      %p127 = scmp.eq.s32.totalorder %s26, 1
      %p128 = por %p126, %p127
      %p129 = scmp.ne.s32.totalorder %s120, %s121
      %p130 = scmp.eq.s32.totalorder %s26, 0
      %p131 = por %p129, %p130
      %p132 = scmp.ne.s32.totalorder %s120, %s121
      %p133 = scmp.eq.s32.totalorder %s27, 1
      %p134 = por %p132, %p133
      %p136 = scmp.ne.s32.totalorder %s121, %s135
      %p137 = scmp.eq.s32.totalorder %s27, 0
      %p138 = por %p136, %p137
      %s140 = sadd.s32 %s139, 1
      %p143 = scmp.eq.s32.totalorder %s21, 1
      %p144 = scmp.ne.s32.totalorder %s139, %s141
      %p145 = scmp.eq.s32.totalorder %s21, 0
      %p146 = por %p144, %p145
      %p147 = scmp.ne.s32.totalorder %s139, %s141
      %p148 = scmp.eq.s32.totalorder %s26, 1
      %p149 = por %p147, %p148
      %p150 = scmp.ne.s32.totalorder %s141, %s142
      %p151 = scmp.eq.s32.totalorder %s26, 0
      %p152 = por %p150, %p151
      %p153 = scmp.ne.s32.totalorder %s141, %s142
      %p154 = scmp.eq.s32.totalorder %s27, 1
      %p155 = por %p153, %p154
      %p157 = scmp.ne.s32.totalorder %s142, %s156
      %p158 = scmp.eq.s32.totalorder %s27, 0
      %p159 = por %p157, %p158
      %s161 = sadd.s32 %s160, 1
      %p164 = scmp.eq.s32.totalorder %s21, 1
      %p165 = scmp.ne.s32.totalorder %s160, %s162
      %p166 = scmp.eq.s32.totalorder %s21, 0
      %p167 = por %p165, %p166
      %p168 = scmp.ne.s32.totalorder %s160, %s162
      %p169 = scmp.eq.s32.totalorder %s26, 1
      %p170 = por %p168, %p169
      %p171 = scmp.ne.s32.totalorder %s162, %s163
      %p172 = scmp.eq.s32.totalorder %s26, 0
      %p173 = por %p171, %p172
      %p174 = scmp.ne.s32.totalorder %s162, %s163
      %p175 = scmp.eq.s32.totalorder %s27, 1
      %p176 = por %p174, %p175
      %p178 = scmp.ne.s32.totalorder %s163, %s177
      %p179 = scmp.eq.s32.totalorder %s27, 0
      %p180 = por %p178, %p179
      %s182 = sadd.s32 %s181, 1
      %p185 = scmp.eq.s32.totalorder %s21, 1
      %p186 = scmp.ne.s32.totalorder %s181, %s183
      %p187 = scmp.eq.s32.totalorder %s21, 0
      %p188 = por %p186, %p187
      %p189 = scmp.ne.s32.totalorder %s181, %s183
      %p190 = scmp.eq.s32.totalorder %s26, 1
      %p191 = por %p189, %p190
      %p192 = scmp.ne.s32.totalorder %s183, %s184
      %p193 = scmp.eq.s32.totalorder %s26, 0
      %p194 = por %p192, %p193
      %p195 = scmp.ne.s32.totalorder %s183, %s184
      %p196 = scmp.eq.s32.totalorder %s27, 1
      %p197 = por %p195, %p196
      %p199 = scmp.ne.s32.totalorder %s184, %s198
      %p200 = scmp.eq.s32.totalorder %s27, 0
      %p201 = por %p199, %p200
      %s202 = ssub.s32 %s21, %s28
      %p203 = scmp.eq.s32.totalorder %s202, 0
      %s205 = sadd.s32 %s204, 1
      %s206 = scalar_select %p203, %s204, %s205
      %p209 = pneg %p203
      %p210 = scmp.eq.s32.totalorder %s21, 1
      %p211 = por %p209, %p210
      %p212 = scmp.ne.s32.totalorder %s204, %s207
      %p213 = scmp.eq.s32.totalorder %s21, 0
      %p214 = por %p212, %p213
      %p215 = scmp.ne.s32.totalorder %s204, %s207
      %p216 = scmp.eq.s32.totalorder %s26, 1
      %p217 = por %p215, %p216
      %p218 = scmp.ne.s32.totalorder %s207, %s208
      %p219 = scmp.eq.s32.totalorder %s26, 0
      %p220 = por %p218, %p219
      %p221 = scmp.ne.s32.totalorder %s207, %s208
      %p222 = scmp.eq.s32.totalorder %s27, 1
      %p223 = por %p221, %p222
      %p225 = scmp.ne.s32.totalorder %s208, %s224
      %p226 = scmp.eq.s32.totalorder %s27, 0
      %p227 = por %p225, %p226
      %p228 = scmp.le.s32.totalorder 1, %s21
      %p229 = scmp.lt.s32.totalorder %s21, 3
      %p230 = pnand %p228, %p229
      %p231 = pneg %p230
      // Predicated region
      $region9: #{tpu_custom_call.1} parent=5 // pred_check
        _
      $region10: #{tpu_custom_call.1} parent=5 // pred_check_branch
        %233 = sbr.rel (%p230) target = $region12
      $region11: #{tpu_custom_call.1} parent=5 // pred_region
        %s234 = ssub.s32 %s21, 1
        // Predicated region
        $region13: #{tpu_custom_call.1} parent=11 // pred_check
          %p235 = pneg %p68
        $region14: #{tpu_custom_call.1} parent=11 // pred_check_branch
          %237 = sbr.rel (%p235) target = $region16
        $region15: #{tpu_custom_call.1} parent=11 // pred_region
          _
        $region16: #{tpu_custom_call.1} parent=11 // pred_fallthru
          _
        // Predicated region
        $region17: #{tpu_custom_call.1} parent=11 // pred_check
          %p238 = pneg %p89
        $region18: #{tpu_custom_call.1} parent=11 // pred_check_branch
          %240 = sbr.rel (%p238) target = $region20
        $region19: #{tpu_custom_call.1} parent=11 // pred_region
          _
        $region20: #{tpu_custom_call.1} parent=11 // pred_fallthru
          _
        // Predicated region
        $region21: #{tpu_custom_call.1} parent=11 // pred_check
          %p241 = pneg %p110
        $region22: #{tpu_custom_call.1} parent=11 // pred_check_branch
          %243 = sbr.rel (%p241) target = $region24
        $region23: #{tpu_custom_call.1} parent=11 // pred_region
          %s245 = ssub.s32 1024, 1024
          %246 = vsyncadd [#allocation6], %s245
          %s247 = sshll.u32 [#allocation5], 4
          %s248 = int_to_ptr.vmem [resolvable:$true] %s247
          %253 = dma.hbm_to_vmem [thread:$0]  %s3, 1024, %s248, [#allocation6], 64, 64, 4
        $region24: #{tpu_custom_call.1} parent=11 // pred_fallthru
          _
        // Predicated region
        $region25: #{tpu_custom_call.1} parent=11 // pred_check
          %p254 = pneg %p131
        $region26: #{tpu_custom_call.1} parent=11 // pred_check_branch
          %256 = sbr.rel (%p254) target = $region28
        $region27: #{tpu_custom_call.1} parent=11 // pred_region
          _
        $region28: #{tpu_custom_call.1} parent=11 // pred_fallthru
          _
        // Predicated region
        $region29: #{tpu_custom_call.1} parent=11 // pred_check
          %p257 = pneg %p152
        $region30: #{tpu_custom_call.1} parent=11 // pred_check_branch
          %259 = sbr.rel (%p257) target = $region32
        $region31: #{tpu_custom_call.1} parent=11 // pred_region
          %s261 = ssub.s32 1024, 1024
          %262 = vsyncadd [#allocation6], %s261
          %s263 = sshll.u32 [#allocation7], 4
          %s264 = int_to_ptr.vmem [resolvable:$true] %s263
          %269 = dma.hbm_to_vmem [thread:$0]  %s5, 1024, %s264, [#allocation6], 64, 64, 4
        $region32: #{tpu_custom_call.1} parent=11 // pred_fallthru
          _
        // Predicated region
        $region33: #{tpu_custom_call.1} parent=11 // pred_check
          %p270 = pneg %p173
        $region34: #{tpu_custom_call.1} parent=11 // pred_check_branch
          %272 = sbr.rel (%p270) target = $region36
        $region35: #{tpu_custom_call.1} parent=11 // pred_region
          _
        $region36: #{tpu_custom_call.1} parent=11 // pred_fallthru
          _
        // Predicated region
        $region37: #{tpu_custom_call.1} parent=11 // pred_check
          %p273 = pneg %p194
        $region38: #{tpu_custom_call.1} parent=11 // pred_check_branch
          %275 = sbr.rel (%p273) target = $region40
        $region39: #{tpu_custom_call.1} parent=11 // pred_region
          _
        $region40: #{tpu_custom_call.1} parent=11 // pred_fallthru
          _
      $region12: #{tpu_custom_call.1} parent=5 // pred_fallthru
        _
      %p276 = scmp.lt.s32.totalorder %s21, 2
      // Predicated region
      $region41: #{tpu_custom_call.1} parent=5 // pred_check
        %p277 = pneg %p276
      $region42: #{tpu_custom_call.1} parent=5 // pred_check_branch
        %279 = sbr.rel (%p277) target = $region44
      $region43: #{tpu_custom_call.1} parent=5 // pred_region
        // Predicated region
        $region45: #{tpu_custom_call.1} parent=43 // pred_check
          %p280 = pneg %p41
        $region46: #{tpu_custom_call.1} parent=43 // pred_check_branch
          %282 = sbr.rel (%p280) target = $region48
        $region47: #{tpu_custom_call.1} parent=43 // pred_region
          %s283 = sand.u32 %s31, 1
          %s284 = scalar_lea.sflag [#allocation3], %s283
          %s285 = sand.u32 %s31, 1
          %s286 = smul.addr %s285, 16
          %s287 = scalar_lea.vmem [#allocation2], %s286
          %s288 = smul.u32 2, %s21
          %s290 = ssub.s32 256, 256
          %291 = vsyncadd %s284, %s290
          %s292 = smul.addr %s288, 128
          %s293 = scalar_lea.hbm %s0, %s292
          %s294 = sshll.u32 %s287, 4
          %s295 = int_to_ptr.vmem [resolvable:$true] %s294
          %300 = dma.hbm_to_vmem [thread:$0]  %s293, 256, %s295, %s284, 128, 128, 8
        $region48: #{tpu_custom_call.1} parent=43 // pred_fallthru
          _
      $region44: #{tpu_custom_call.1} parent=5 // pred_fallthru
        _
      %p301 = scmp.le.s32.totalorder 1, %s21
      %p302 = scmp.lt.s32.totalorder %s21, 3
      %p303 = pnand %p301, %p302
      %p304 = pneg %p303
      // Predicated region
      $region49: #{tpu_custom_call.1} parent=5 // pred_check
        _
      $region50: #{tpu_custom_call.1} parent=5 // pred_check_branch
        %306 = sbr.rel (%p303) target = $region52
      $region51: #{tpu_custom_call.1} parent=5 // pred_region
        %s307 = ssub.s32 %s21, 1
        %s308 = sand.u32 %s34, 1
        %s309 = scalar_lea.sflag [#allocation3], %s308
        %s310 = sand.u32 %s34, 1
        %s311 = smul.addr %s310, 16
        %s312 = scalar_lea.vmem [#allocation2], %s311
        // Predicated region
        $region53: #{tpu_custom_call.1} parent=51 // pred_check
          %p313 = pneg %p47
        $region54: #{tpu_custom_call.1} parent=51 // pred_check_branch
          %315 = sbr.rel (%p313) target = $region56
        $region55: #{tpu_custom_call.1} parent=51 // pred_region
          %316 = dma.done %s309, 256
        $region56: #{tpu_custom_call.1} parent=51 // pred_fallthru
          _
        // Predicated region
        $region57: #{tpu_custom_call.1} parent=51 // pred_check
          %p317 = pneg %p110
        $region58: #{tpu_custom_call.1} parent=51 // pred_check_branch
          %319 = sbr.rel (%p317) target = $region60
        $region59: #{tpu_custom_call.1} parent=51 // pred_region
          %320 = dma.done [#allocation6], 1024
        $region60: #{tpu_custom_call.1} parent=51 // pred_fallthru
          _
        // Predicated region
        $region61: #{tpu_custom_call.1} parent=51 // pred_check
          %p321 = pneg %p152
        $region62: #{tpu_custom_call.1} parent=51 // pred_check_branch
          %323 = sbr.rel (%p321) target = $region64
        $region63: #{tpu_custom_call.1} parent=51 // pred_region
          %324 = dma.done [#allocation6], 1024
        $region64: #{tpu_custom_call.1} parent=51 // pred_fallthru
          _
        %s325 = sand.u32 %s34, 1
        %s326 = scalar_lea.sflag [#allocation3], %s325
        %s327 = sand.u32 %s34, 1
        %s328 = smul.addr %s327, 16
        %s329 = scalar_lea.vmem [#allocation2], %s328
        %p330 = pneg %p47
        %p331 = pneg %p44
        %p332 = pneg %p68
        %p333 = pneg %p65
        %p334 = pneg %p89
        %p335 = pneg %p86
        %p336 = pneg %p110
        %p337 = pneg %p107
        %p338 = pneg %p131
        %p339 = pneg %p128
        %p340 = pneg %p152
        %p341 = pneg %p149
        %p342 = pneg %p173
        %p343 = pneg %p170
        %p344 = pneg %p194
        %p345 = pneg %p191
        %p346 = pneg %p220
        %p347 = pneg %p217
        %s348 = sand.u32 %s207, 1
        %s349 = scalar_lea.sflag [#allocation4], %s348
        %s350 = sand.u32 %s207, 1
        %s351 = smul.addr %s350, 16
        %s352 = scalar_lea.vmem [#allocation8], %s351
        %s353 = smul.u32 2, %s26
        %s354 = smul.u32 2, %s26
        %v356 = vld [vmem:[%s312] sm:$0xff]
        %v357 = vld [vmem:[%s312 + $0x8] sm:$0xff]
        %358 = vadd.xlane.f32.xlu0 %v356
        %v359 = vpop.xlane.xlu0 %358
        %360 = vadd.xlane.f32.xlu0 %v357
        %v361 = vpop.xlane.xlu0 %360
        %v362 = vmul.f32 %v356, %v356
        %v363 = vmul.f32 %v357, %v357
        %364 = vadd.xlane.f32.xlu0 %v362
        %v365 = vpop.xlane.xlu0 %364
        %366 = vadd.xlane.f32.xlu0 %v363
        %v367 = vpop.xlane.xlu0 %366
        %v368 = vmul.f32 %v359, 0.0078125
        %v369 = vmul.f32 %v361, 0.0078125
        %v370 = vmul.f32 %v365, 0.0078125
        %v371 = vmul.f32 %v367, 0.0078125
        %v372 = vmul.f32 %v368, %v368
        %v373 = vmul.f32 %v369, %v369
        %v374 = vsub.f32 %v370, %v372
        %v375 = vsub.f32 %v371, %v373
        %v376 = vsub.f32 %v356, %v368
        %v377 = vsub.f32 %v357, %v369
        %v378 = vadd.f32 %v374, 1e-05
        %v379 = vadd.f32 %v375, 1e-05
        %v380 = vrsqrt.pop %v378
        %v381 = vrsqrt.pop %v379
        %v382 = vmul.f32 %v376, %v380
        %v383 = vmul.f32 %v377, %v381
        %v384 = vld [vmem:[%s1] sm:$0x1]
        %v386 = vlaneseq
        %v387 = vshrl.u32 %v386, 7
        %v388 = vsub.s32 0, %v387
        %v389 = vrot.slane %v384, %v388
        %v391 = vmul.f32 %v382, %v389
        %v392 = vmul.f32 %v383, %v389
        %v393 = vld [vmem:[%s2] sm:$0x1]
        %v395 = vlaneseq
        %v396 = vshrl.u32 %v395, 7
        %v397 = vsub.s32 0, %v396
        %v398 = vrot.slane %v393, %v397
        %v400 = vadd.f32 %v391, %v398
        %v401 = vadd.f32 %v392, %v398
        %v402 = vpack.c.bf16 %v401, %v400
        %v403 = vld [vmem:[#allocation5] sm:$0xf]
        %v404 = vld [vmem:[#allocation5 + $0x4] sm:$0xf]
        %v405 = vld [vmem:[#allocation5 + $0x8] sm:$0xf]
        %v406 = vld [vmem:[#allocation5 + $0xc] sm:$0xf]
        %v407 = vld [vmem:[#allocation5 + $0x10] sm:$0xf]
        %v408 = vld [vmem:[#allocation5 + $0x14] sm:$0xf]
        %v409 = vld [vmem:[#allocation5 + $0x18] sm:$0xf]
        %v410 = vld [vmem:[#allocation5 + $0x1c] sm:$0xf]
        %v411 = vld [vmem:[#allocation5 + $0x20] sm:$0xf]
        %v412 = vld [vmem:[#allocation5 + $0x24] sm:$0xf]
        %v413 = vld [vmem:[#allocation5 + $0x28] sm:$0xf]
        %v414 = vld [vmem:[#allocation5 + $0x2c] sm:$0xf]
        %v415 = vld [vmem:[#allocation5 + $0x30] sm:$0xf]
        %v416 = vld [vmem:[#allocation5 + $0x34] sm:$0xf]
        %v417 = vld [vmem:[#allocation5 + $0x38] sm:$0xf]
        %v418 = vld [vmem:[#allocation5 + $0x3c] sm:$0xf]
        %v419 = vld [vmem:[%s4] sm:$0x1]
        %v421 = vlaneseq
        %v422 = vshrl.u32 %v421, 7
        %v423 = vsub.s32 0, %v422
        %v424 = vrot.slane %v419, %v423
        %v442 = vunpack.c.l.b16 %v403
        %v443 = vunpack.c.l.b16 %v404
        %v444 = vunpack.c.l.b16 %v405
        %v445 = vunpack.c.l.b16 %v406
        %v446 = vunpack.c.l.b16 %v407
        %v447 = vunpack.c.l.b16 %v408
        %v448 = vunpack.c.l.b16 %v409
        %v449 = vunpack.c.l.b16 %v410
        %v450 = vunpack.c.l.b16 %v411
        %v451 = vunpack.c.l.b16 %v412
        %v452 = vunpack.c.l.b16 %v413
        %v453 = vunpack.c.l.b16 %v414
        %v454 = vunpack.c.l.b16 %v415
        %v455 = vunpack.c.l.b16 %v416
        %v456 = vunpack.c.l.b16 %v417
        %v457 = vunpack.c.l.b16 %v418
        %v458 = vpack.c.b16 %v443, %v442
        %v459 = vpack.c.b16 %v445, %v444
        %v460 = vpack.c.b16 %v447, %v446
        %v461 = vpack.c.b16 %v449, %v448
        %v462 = vpack.c.b16 %v451, %v450
        %v463 = vpack.c.b16 %v453, %v452
        %v464 = vpack.c.b16 %v455, %v454
        %v465 = vpack.c.b16 %v457, %v456
        %474 = vmatprep.subr.bf16.mxu0 0
        %475 = vmatpush1.bf16.msra.mxu0 %v458
        %476 = vmatprep.subr.bf16.mxu0 0
        %477 = vmatpush1.bf16.msra.mxu0 %v459
        %478 = vmatprep.subr.bf16.mxu0 0
        %479 = vmatpush1.bf16.msra.mxu0 %v460
        %480 = vmatprep.subr.bf16.mxu0 0
        %481 = vmatpush1.bf16.msra.mxu0 %v461
        %482 = vmatprep.subr.bf16.mxu0 0
        %483 = vmatpush1.bf16.msra.mxu0 %v462
        %484 = vmatprep.subr.bf16.mxu0 0
        %485 = vmatpush1.bf16.msra.mxu0 %v463
        %486 = vmatprep.subr.bf16.mxu0 0
        %487 = vmatpush1.bf16.msra.mxu0 %v464
        %488 = vmatprep.subr.bf16.mxu0 0
        %489 = vmatpush1.bf16.msra.mxu0 %v465
        %490 = vmatprep.subr.bf16.mxu0 0
        %491 = vmatpush1.bf16.msra.mxu0 0
        %492 = vmatprep.subr.bf16.mxu0 0
        %493 = vmatpush1.bf16.msra.mxu0 0
        %494 = vmatprep.subr.bf16.mxu0 0
        %495 = vmatpush1.bf16.msra.mxu0 0
        %496 = vmatprep.subr.bf16.mxu0 0
        %497 = vmatpush1.bf16.msra.mxu0 0
        %498 = vmatprep.subr.bf16.mxu0 0
        %499 = vmatpush1.bf16.msra.mxu0 0
        %500 = vmatprep.subr.bf16.mxu0 0
        %501 = vmatpush1.bf16.msra.mxu0 0
        %502 = vmatprep.subr.bf16.mxu0 0
        %503 = vmatpush1.bf16.msra.mxu0 0
        %504 = vmatprep.subr.bf16.mxu0 0
        %505 = vmatpush1.bf16.msra.mxu0 0
        %506 = vmatprep.mubr.bf16.mxu0 0
        %507 = vmatmul.mubr.bf16.gmra.mrb[0].mxu0 %v402
        %v508 = vpop.f32.mrb[0].mxu0
        %v509 = vadd.f32 %v424, %v508
        %v510 = vpop.f32.mrb[0].mxu0
        %v511 = vpop.f32.mrb[0].mxu0
        %v512 = vadd.f32 %v424, %v511
        %v513 = vpop.f32.mrb[0].mxu0
        %514 = vdwg.mxu0
        %v515 = vmax.f32 %v509, 0.0
        %v516 = vmax.f32 %v512, 0.0
        %v517 = vpack.c.bf16 %v516, %v515
        %v518 = vld [vmem:[#allocation7] sm:$0xf]
        %v519 = vld [vmem:[#allocation7 + $0x4] sm:$0xf]
        %v520 = vld [vmem:[#allocation7 + $0x8] sm:$0xf]
        %v521 = vld [vmem:[#allocation7 + $0xc] sm:$0xf]
        %v522 = vld [vmem:[#allocation7 + $0x10] sm:$0xf]
        %v523 = vld [vmem:[#allocation7 + $0x14] sm:$0xf]
        %v524 = vld [vmem:[#allocation7 + $0x18] sm:$0xf]
        %v525 = vld [vmem:[#allocation7 + $0x1c] sm:$0xf]
        %v526 = vld [vmem:[#allocation7 + $0x20] sm:$0xf]
        %v527 = vld [vmem:[#allocation7 + $0x24] sm:$0xf]
        %v528 = vld [vmem:[#allocation7 + $0x28] sm:$0xf]
        %v529 = vld [vmem:[#allocation7 + $0x2c] sm:$0xf]
        %v530 = vld [vmem:[#allocation7 + $0x30] sm:$0xf]
        %v531 = vld [vmem:[#allocation7 + $0x34] sm:$0xf]
        %v532 = vld [vmem:[#allocation7 + $0x38] sm:$0xf]
        %v533 = vld [vmem:[#allocation7 + $0x3c] sm:$0xf]
        %v534 = vld [vmem:[%s6] sm:$0x1]
        %v536 = vlaneseq
        %v537 = vshrl.u32 %v536, 7
        %v538 = vsub.s32 0, %v537
        %v539 = vrot.slane %v534, %v538
        %v557 = vunpack.c.l.b16 %v518
        %v558 = vunpack.c.l.b16 %v519
        %v559 = vunpack.c.l.b16 %v520
        %v560 = vunpack.c.l.b16 %v521
        %v561 = vunpack.c.l.b16 %v522
        %v562 = vunpack.c.l.b16 %v523
        %v563 = vunpack.c.l.b16 %v524
        %v564 = vunpack.c.l.b16 %v525
        %v565 = vunpack.c.l.b16 %v526
        %v566 = vunpack.c.l.b16 %v527
        %v567 = vunpack.c.l.b16 %v528
        %v568 = vunpack.c.l.b16 %v529
        %v569 = vunpack.c.l.b16 %v530
        %v570 = vunpack.c.l.b16 %v531
        %v571 = vunpack.c.l.b16 %v532
        %v572 = vunpack.c.l.b16 %v533
        %v573 = vpack.c.b16 %v558, %v557
        %v574 = vpack.c.b16 %v560, %v559
        %v575 = vpack.c.b16 %v562, %v561
        %v576 = vpack.c.b16 %v564, %v563
        %v577 = vpack.c.b16 %v566, %v565
        %v578 = vpack.c.b16 %v568, %v567
        %v579 = vpack.c.b16 %v570, %v569
        %v580 = vpack.c.b16 %v572, %v571
        %589 = vmatprep.subr.bf16.mxu0 0
        %590 = vmatpush1.bf16.msra.mxu0 %v573
        %591 = vmatprep.subr.bf16.mxu0 0
        %592 = vmatpush1.bf16.msra.mxu0 %v574
        %593 = vmatprep.subr.bf16.mxu0 0
        %594 = vmatpush1.bf16.msra.mxu0 %v575
        %595 = vmatprep.subr.bf16.mxu0 0
        %596 = vmatpush1.bf16.msra.mxu0 %v576
        %597 = vmatprep.subr.bf16.mxu0 0
        %598 = vmatpush1.bf16.msra.mxu0 %v577
        %599 = vmatprep.subr.bf16.mxu0 0
        %600 = vmatpush1.bf16.msra.mxu0 %v578
        %601 = vmatprep.subr.bf16.mxu0 0
        %602 = vmatpush1.bf16.msra.mxu0 %v579
        %603 = vmatprep.subr.bf16.mxu0 0
        %604 = vmatpush1.bf16.msra.mxu0 %v580
        %605 = vmatprep.subr.bf16.mxu0 0
        %606 = vmatpush1.bf16.msra.mxu0 0
        %607 = vmatprep.subr.bf16.mxu0 0
        %608 = vmatpush1.bf16.msra.mxu0 0
        %609 = vmatprep.subr.bf16.mxu0 0
        %610 = vmatpush1.bf16.msra.mxu0 0
        %611 = vmatprep.subr.bf16.mxu0 0
        %612 = vmatpush1.bf16.msra.mxu0 0
        %613 = vmatprep.subr.bf16.mxu0 0
        %614 = vmatpush1.bf16.msra.mxu0 0
        %615 = vmatprep.subr.bf16.mxu0 0
        %616 = vmatpush1.bf16.msra.mxu0 0
        %617 = vmatprep.subr.bf16.mxu0 0
        %618 = vmatpush1.bf16.msra.mxu0 0
        %619 = vmatprep.subr.bf16.mxu0 0
        %620 = vmatpush1.bf16.msra.mxu0 0
        %621 = vmatprep.mubr.bf16.mxu0 0
        %622 = vmatmul.mubr.bf16.gmra.mrb[0].mxu0 %v517
        %v623 = vpop.f32.mrb[0].mxu0
        %v624 = vadd.f32 %v539, %v623
        %v625 = vpop.f32.mrb[0].mxu0
        %v626 = vpop.f32.mrb[0].mxu0
        %v627 = vadd.f32 %v539, %v626
        %v628 = vpop.f32.mrb[0].mxu0
        %629 = vdwg.mxu0
        %v630 = vld [vmem:[%s7] sm:$0x1]
        %v632 = vlaneseq
        %v633 = vshrl.u32 %v632, 7
        %v634 = vsub.s32 0, %v633
        %v635 = vrot.slane %v630, %v634
        %v637 = vmul.f32 %v624, %v635
        %v638 = vmul.f32 %v627, %v635
        %639 = vst [vmem:[%s352] sm:$0xff] %v637
        %640 = vst [vmem:[%s352 + $0x8] sm:$0xff] %v638
        %s641 = sand.u32 %s207, 1
        %s642 = scalar_lea.sflag [#allocation4], %s641
        %s643 = sand.u32 %s207, 1
        %s644 = smul.addr %s643, 16
        %s645 = scalar_lea.vmem [#allocation8], %s644
        // Predicated region
        $region65: #{tpu_custom_call.1} parent=51 // pred_check
          %p646 = pneg %p217
        $region66: #{tpu_custom_call.1} parent=51 // pred_check_branch
          %648 = sbr.rel (%p646) target = $region68
        $region67: #{tpu_custom_call.1} parent=51 // pred_region
          %s649 = smul.u32 2, %s26
          %s651 = ssub.s32 256, 256
          %652 = vsyncadd %s642, %s651
          %s653 = smul.addr %s649, 128
          %s654 = scalar_lea.hbm %s8, %s653
          %s655 = sshll.u32 %s645, 4
          %s656 = int_to_ptr.vmem [resolvable:$true] %s655
          %661 = dma.vmem_to_hbm [thread:$0]  %s656, 256, %s654, %s642, 128, 128, 8
        $region68: #{tpu_custom_call.1} parent=51 // pred_fallthru
          _
      $region52: #{tpu_custom_call.1} parent=5 // pred_fallthru
        _
      %p662 = scmp.le.s32.totalorder 2, %s21
      // Predicated region
      $region69: #{tpu_custom_call.1} parent=5 // pred_check
        %p663 = pneg %p662
      $region70: #{tpu_custom_call.1} parent=5 // pred_check_branch
        %665 = sbr.rel (%p663) target = $region72
      $region71: #{tpu_custom_call.1} parent=5 // pred_region
        %s666 = ssub.s32 %s21, 2
        // Predicated region
        $region73: #{tpu_custom_call.1} parent=71 // pred_check
          %p667 = pneg %p223
        $region74: #{tpu_custom_call.1} parent=71 // pred_check_branch
          %669 = sbr.rel (%p667) target = $region76
        $region75: #{tpu_custom_call.1} parent=71 // pred_region
          %s670 = sand.u32 %s208, 1
          %s671 = scalar_lea.sflag [#allocation4], %s670
          %s672 = sand.u32 %s208, 1
          %s673 = smul.addr %s672, 16
          %s674 = scalar_lea.vmem [#allocation8], %s673
          %675 = dma.done %s671, 256
        $region76: #{tpu_custom_call.1} parent=71 // pred_fallthru
          _
      $region72: #{tpu_custom_call.1} parent=5 // pred_fallthru
        _
    $region6: #{tpu_custom_call.1} parent=1 // loop_footer
      %s25 = sadd.s32 1, %s21
    $region7: #{tpu_custom_call.1} parent=1 // loop_footer_branch
      %20 = sbr.rel target = $region3
    $region8: #{tpu_custom_call.1} parent=1 // loop_exit
      _
    %676 = vsyncpa [#allocation3], 1
    %s677 = scalar_lea.sflag [#allocation3], 1
    %678 = vsyncpa %s677, 1
    %679 = vsyncpa [#allocation6], 1
    %680 = vsyncpa [#allocation4], 1
    %s681 = scalar_lea.sflag [#allocation4], 1
    %682 = vsyncpa %s681, 1

</llo_original>
